<compile_context>
chip_gen: v6e
topology: v6e:2x2x1
jax: 0.10.0
libtpu: 0.0.40
codegen_flags: <defaults>
</compile_context>

<pallas_src>
import jax
import jax.numpy as jnp
from jax.experimental import pallas as pl
from jax.experimental.pallas import tpu as pltpu


def rnn_kernel(x_ref, whh_ref, wxh_ref, bh_ref, why_ref, by_ref,
               y_ref, hs_scratch):
    B, T, Xd = x_ref.shape
    H = whh_ref.shape[0]
    Yd = why_ref.shape[1]

    # ---- hoisted input projection (no sequential dependency) -------------
    # One (B*T, Xd) @ (Xd, H) matmul replaces T tiny per-step matmuls on the
    # sequential path.  Reshape (B, T, Xd) -> (B*T, Xd) is layout-preserving
    # for T % 8 == 0.
    x_flat = x_ref[...].reshape(B * T, Xd)
    xw = (jnp.dot(x_flat, wxh_ref[...], preferred_element_type=jnp.float32)
          + bh_ref[...]).reshape(B, T, H)

    whh = whh_ref[...]  # load once; reused every step

    # ---- sequential recurrence: only h @ W_hh + tanh per step -------------
    h = jnp.zeros((B, H), jnp.float32)
    for t in range(T):                      # static unroll; T is small/known
        h = jnp.tanh(
            jnp.dot(h, whh, preferred_element_type=jnp.float32) + xw[:, t, :])
        hs_scratch[:, t, :] = h             # keep h_t in f32 VMEM

    # ---- hoisted output projection + single writeback ---------------------
    hs = hs_scratch[...].reshape(B * T, H)
    y = (jnp.dot(hs, why_ref[...], preferred_element_type=jnp.float32)
         + by_ref[...])
    y_ref[...] = y.reshape(B, T, Yd).astype(y_ref.dtype)


def rnn_forward(X, W_hh, W_xh, b_h, W_hy, b_y):
    """X: (batch, seq, x_dim) -> (batch, seq, y_dim).  Matches the torch module."""
    B, T, Xd = X.shape
    H = W_hh.shape[0]
    Yd = W_hy.shape[1]

    vmem_specs = [pl.BlockSpec(memory_space=pltpu.MemorySpace.VMEM)
                  for _ in range(6)]

    return pl.pallas_call(
        rnn_kernel,
        out_shape=jax.ShapeDtypeStruct((B, T, Yd), X.dtype),
        in_specs=vmem_specs,
        out_specs=pl.BlockSpec(memory_space=pltpu.MemorySpace.VMEM),
        scratch_shapes=[pltpu.VMEM((B, T, H), jnp.float32)],
    )(X, W_hh, W_xh, b_h, W_hy, b_y)


def rnn_reference(X, W_hh, W_xh, b_h, W_hy, b_y):
    """Pure-JAX reference mirroring the PyTorch module."""
    B = X.shape[0]
    H = W_hh.shape[0]
    h0 = jnp.zeros((B, H), dtype=jnp.float32)

    def step(h, x):
        h = jnp.tanh(h @ W_hh + x @ W_xh + b_h)
        y = h @ W_hy + b_y
        return h, y

    _, ys = jax.lax.scan(step, h0, jnp.transpose(X, (1, 0, 2)))
    return jnp.transpose(ys, (1, 0, 2)).astype(X.dtype)


if __name__ == "__main__":
    # Shapes implied by the module: X (batch, seq, x_dim).
    batch, seq, x_dim, hidden_dim, y_dim = 4, 8, 16, 32, 8

    key = jax.random.PRNGKey(0)
    k_x, k_whh, k_wxh, k_why = jax.random.split(key, 4)

    X = jax.random.normal(k_x, (batch, seq, x_dim), dtype=jnp.float32)
    W_hh = jax.random.normal(k_whh, (hidden_dim, hidden_dim), jnp.float32) * 0.1
    W_xh = jax.random.normal(k_wxh, (x_dim, hidden_dim), jnp.float32) * 0.1
    b_h = jnp.zeros((1, hidden_dim), jnp.float32)
    W_hy = jax.random.normal(k_why, (hidden_dim, y_dim), jnp.float32) * 0.1
    b_y = jnp.zeros((1, y_dim), jnp.float32)

    out = rnn_forward(X, W_hh, W_xh, b_h, W_hy, b_y)
    out = jax.block_until_ready(out)

    ref = rnn_reference(X, W_hh, W_xh, b_h, W_hy, b_y)
    assert out.shape == (batch, seq, y_dim)
    assert jnp.allclose(out, ref, atol=1e-5, rtol=1e-5), "mismatch vs reference"

    print("KERNEL_OK")
</pallas_src>

<mosaic_0001>
module attributes {stable_mosaic.version = 11 : i64} {
  func.func @rnn_kernel(%arg0: memref<4x8x16xf32, #tpu.memory_space<vmem>>, %arg1: memref<32x32xf32, #tpu.memory_space<vmem>>, %arg2: memref<16x32xf32, #tpu.memory_space<vmem>>, %arg3: memref<1x32xf32, #tpu.memory_space<vmem>>, %arg4: memref<32x8xf32, #tpu.memory_space<vmem>>, %arg5: memref<1x8xf32, #tpu.memory_space<vmem>>, %arg6: memref<4x8x8xf32, #tpu.memory_space<vmem>>, %arg7: memref<4x8x32xf32, #tpu.memory_space<vmem>>) attributes {dimension_semantics = [], scalar_prefetch = 0 : i64, scratch_operands = 1 : i64, tpu.core_type = #tpu.core_type<tc>} {
    %c0 = arith.constant 0 : index
    %c0_0 = arith.constant 0 : index
    %c0_1 = arith.constant 0 : index
    %0 = vector.load %arg0[%c0, %c0_0, %c0_1] : memref<4x8x16xf32, #tpu.memory_space<vmem>>, vector<4x8x16xf32>
    %1 = vector.shape_cast %0 : vector<4x8x16xf32> to vector<32x16xf32>
    %c0_2 = arith.constant 0 : index
    %c0_3 = arith.constant 0 : index
    %2 = vector.load %arg2[%c0_2, %c0_3] : memref<16x32xf32, #tpu.memory_space<vmem>>, vector<16x32xf32>
    %cst = arith.constant dense<0.000000e+00> : vector<32x32xf32>
    %3 = tpu.matmul %1, %2, %cst {dimension_numbers = #tpu.dot_dimension_numbers<[1], [0], [0], [1], [0, 0, 1, 1], [], []>} : vector<32x16xf32>, vector<16x32xf32>, vector<32x32xf32> -> vector<32x32xf32>
    %c0_4 = arith.constant 0 : index
    %c0_5 = arith.constant 0 : index
    %4 = vector.load %arg3[%c0_4, %c0_5] : memref<1x32xf32, #tpu.memory_space<vmem>>, vector<1x32xf32>
    %5 = vector.broadcast %4 : vector<1x32xf32> to vector<32x32xf32>
    %6 = arith.addf %3, %5 : vector<32x32xf32>
    %7 = vector.shape_cast %6 : vector<32x32xf32> to vector<4x8x32xf32>
    %c0_6 = arith.constant 0 : index
    %c0_7 = arith.constant 0 : index
    %8 = vector.load %arg1[%c0_6, %c0_7] : memref<32x32xf32, #tpu.memory_space<vmem>>, vector<32x32xf32>
    %cst_8 = arith.constant 0.000000e+00 : f32
    %9 = vector.broadcast %cst_8 : f32 to vector<4x32xf32>
    %cst_9 = arith.constant dense<0.000000e+00> : vector<4x32xf32>
    %10 = tpu.matmul %9, %8, %cst_9 {dimension_numbers = #tpu.dot_dimension_numbers<[1], [0], [0], [1], [0, 0, 1, 1], [], []>} : vector<4x32xf32>, vector<32x32xf32>, vector<4x32xf32> -> vector<4x32xf32>
    %11 = vector.extract_strided_slice %7 {offsets = [0, 0, 0], sizes = [4, 1, 32], strides = [1, 1, 1]} : vector<4x8x32xf32> to vector<4x1x32xf32>
    %12 = vector.shape_cast %11 : vector<4x1x32xf32> to vector<4x32xf32>
    %13 = arith.addf %10, %12 : vector<4x32xf32>
    %14 = math.tanh %13 : vector<4x32xf32>
    %c0_10 = arith.constant 0 : index
    %c0_11 = arith.constant 0 : index
    %c0_12 = arith.constant 0 : index
    %15 = vector.load %arg7[%c0_10, %c0_11, %c0_12] : memref<4x8x32xf32, #tpu.memory_space<vmem>>, vector<4x1x32xf32>
    %16 = vector.shape_cast %15 : vector<4x1x32xf32> to vector<4x32xf32>
    %17 = vector.shape_cast %14 : vector<4x32xf32> to vector<4x1x32xf32>
    tpu.vector_store %arg7[%c0_10, %c0_11, %c0_12], %17 {strides = array<i32>} : memref<4x8x32xf32, #tpu.memory_space<vmem>>, vector<4x1x32xf32>,
    %cst_13 = arith.constant dense<0.000000e+00> : vector<4x32xf32>
    %18 = tpu.matmul %14, %8, %cst_13 {dimension_numbers = #tpu.dot_dimension_numbers<[1], [0], [0], [1], [0, 0, 1, 1], [], []>} : vector<4x32xf32>, vector<32x32xf32>, vector<4x32xf32> -> vector<4x32xf32>
    %19 = vector.extract_strided_slice %7 {offsets = [0, 1, 0], sizes = [4, 1, 32], strides = [1, 1, 1]} : vector<4x8x32xf32> to vector<4x1x32xf32>
    %20 = vector.shape_cast %19 : vector<4x1x32xf32> to vector<4x32xf32>
    %21 = arith.addf %18, %20 : vector<4x32xf32>
    %22 = math.tanh %21 : vector<4x32xf32>
    %c0_14 = arith.constant 0 : index
    %c1 = arith.constant 1 : index
    %c0_15 = arith.constant 0 : index
    %23 = vector.load %arg7[%c0_14, %c1, %c0_15] : memref<4x8x32xf32, #tpu.memory_space<vmem>>, vector<4x1x32xf32>
    %24 = vector.shape_cast %23 : vector<4x1x32xf32> to vector<4x32xf32>
    %25 = vector.shape_cast %22 : vector<4x32xf32> to vector<4x1x32xf32>
    tpu.vector_store %arg7[%c0_14, %c1, %c0_15], %25 {strides = array<i32>} : memref<4x8x32xf32, #tpu.memory_space<vmem>>, vector<4x1x32xf32>,
    %cst_16 = arith.constant dense<0.000000e+00> : vector<4x32xf32>
    %26 = tpu.matmul %22, %8, %cst_16 {dimension_numbers = #tpu.dot_dimension_numbers<[1], [0], [0], [1], [0, 0, 1, 1], [], []>} : vector<4x32xf32>, vector<32x32xf32>, vector<4x32xf32> -> vector<4x32xf32>
    %27 = vector.extract_strided_slice %7 {offsets = [0, 2, 0], sizes = [4, 1, 32], strides = [1, 1, 1]} : vector<4x8x32xf32> to vector<4x1x32xf32>
    %28 = vector.shape_cast %27 : vector<4x1x32xf32> to vector<4x32xf32>
    %29 = arith.addf %26, %28 : vector<4x32xf32>
    %30 = math.tanh %29 : vector<4x32xf32>
    %c0_17 = arith.constant 0 : index
    %c2 = arith.constant 2 : index
    %c0_18 = arith.constant 0 : index
    %31 = vector.load %arg7[%c0_17, %c2, %c0_18] : memref<4x8x32xf32, #tpu.memory_space<vmem>>, vector<4x1x32xf32>
    %32 = vector.shape_cast %31 : vector<4x1x32xf32> to vector<4x32xf32>
    %33 = vector.shape_cast %30 : vector<4x32xf32> to vector<4x1x32xf32>
    tpu.vector_store %arg7[%c0_17, %c2, %c0_18], %33 {strides = array<i32>} : memref<4x8x32xf32, #tpu.memory_space<vmem>>, vector<4x1x32xf32>,
    %cst_19 = arith.constant dense<0.000000e+00> : vector<4x32xf32>
    %34 = tpu.matmul %30, %8, %cst_19 {dimension_numbers = #tpu.dot_dimension_numbers<[1], [0], [0], [1], [0, 0, 1, 1], [], []>} : vector<4x32xf32>, vector<32x32xf32>, vector<4x32xf32> -> vector<4x32xf32>
    %35 = vector.extract_strided_slice %7 {offsets = [0, 3, 0], sizes = [4, 1, 32], strides = [1, 1, 1]} : vector<4x8x32xf32> to vector<4x1x32xf32>
    %36 = vector.shape_cast %35 : vector<4x1x32xf32> to vector<4x32xf32>
    %37 = arith.addf %34, %36 : vector<4x32xf32>
    %38 = math.tanh %37 : vector<4x32xf32>
    %c0_20 = arith.constant 0 : index
    %c3 = arith.constant 3 : index
    %c0_21 = arith.constant 0 : index
    %39 = vector.load %arg7[%c0_20, %c3, %c0_21] : memref<4x8x32xf32, #tpu.memory_space<vmem>>, vector<4x1x32xf32>
    %40 = vector.shape_cast %39 : vector<4x1x32xf32> to vector<4x32xf32>
    %41 = vector.shape_cast %38 : vector<4x32xf32> to vector<4x1x32xf32>
    tpu.vector_store %arg7[%c0_20, %c3, %c0_21], %41 {strides = array<i32>} : memref<4x8x32xf32, #tpu.memory_space<vmem>>, vector<4x1x32xf32>,
    %cst_22 = arith.constant dense<0.000000e+00> : vector<4x32xf32>
    %42 = tpu.matmul %38, %8, %cst_22 {dimension_numbers = #tpu.dot_dimension_numbers<[1], [0], [0], [1], [0, 0, 1, 1], [], []>} : vector<4x32xf32>, vector<32x32xf32>, vector<4x32xf32> -> vector<4x32xf32>
    %43 = vector.extract_strided_slice %7 {offsets = [0, 4, 0], sizes = [4, 1, 32], strides = [1, 1, 1]} : vector<4x8x32xf32> to vector<4x1x32xf32>
    %44 = vector.shape_cast %43 : vector<4x1x32xf32> to vector<4x32xf32>
    %45 = arith.addf %42, %44 : vector<4x32xf32>
    %46 = math.tanh %45 : vector<4x32xf32>
    %c0_23 = arith.constant 0 : index
    %c4 = arith.constant 4 : index
    %c0_24 = arith.constant 0 : index
    %47 = vector.load %arg7[%c0_23, %c4, %c0_24] : memref<4x8x32xf32, #tpu.memory_space<vmem>>, vector<4x1x32xf32>
    %48 = vector.shape_cast %47 : vector<4x1x32xf32> to vector<4x32xf32>
    %49 = vector.shape_cast %46 : vector<4x32xf32> to vector<4x1x32xf32>
    tpu.vector_store %arg7[%c0_23, %c4, %c0_24], %49 {strides = array<i32>} : memref<4x8x32xf32, #tpu.memory_space<vmem>>, vector<4x1x32xf32>,
    %cst_25 = arith.constant dense<0.000000e+00> : vector<4x32xf32>
    %50 = tpu.matmul %46, %8, %cst_25 {dimension_numbers = #tpu.dot_dimension_numbers<[1], [0], [0], [1], [0, 0, 1, 1], [], []>} : vector<4x32xf32>, vector<32x32xf32>, vector<4x32xf32> -> vector<4x32xf32>
    %51 = vector.extract_strided_slice %7 {offsets = [0, 5, 0], sizes = [4, 1, 32], strides = [1, 1, 1]} : vector<4x8x32xf32> to vector<4x1x32xf32>
    %52 = vector.shape_cast %51 : vector<4x1x32xf32> to vector<4x32xf32>
    %53 = arith.addf %50, %52 : vector<4x32xf32>
    %54 = math.tanh %53 : vector<4x32xf32>
    %c0_26 = arith.constant 0 : index
    %c5 = arith.constant 5 : index
    %c0_27 = arith.constant 0 : index
    %55 = vector.load %arg7[%c0_26, %c5, %c0_27] : memref<4x8x32xf32, #tpu.memory_space<vmem>>, vector<4x1x32xf32>
    %56 = vector.shape_cast %55 : vector<4x1x32xf32> to vector<4x32xf32>
    %57 = vector.shape_cast %54 : vector<4x32xf32> to vector<4x1x32xf32>
    tpu.vector_store %arg7[%c0_26, %c5, %c0_27], %57 {strides = array<i32>} : memref<4x8x32xf32, #tpu.memory_space<vmem>>, vector<4x1x32xf32>,
    %cst_28 = arith.constant dense<0.000000e+00> : vector<4x32xf32>
    %58 = tpu.matmul %54, %8, %cst_28 {dimension_numbers = #tpu.dot_dimension_numbers<[1], [0], [0], [1], [0, 0, 1, 1], [], []>} : vector<4x32xf32>, vector<32x32xf32>, vector<4x32xf32> -> vector<4x32xf32>
    %59 = vector.extract_strided_slice %7 {offsets = [0, 6, 0], sizes = [4, 1, 32], strides = [1, 1, 1]} : vector<4x8x32xf32> to vector<4x1x32xf32>
    %60 = vector.shape_cast %59 : vector<4x1x32xf32> to vector<4x32xf32>
    %61 = arith.addf %58, %60 : vector<4x32xf32>
    %62 = math.tanh %61 : vector<4x32xf32>
    %c0_29 = arith.constant 0 : index
    %c6 = arith.constant 6 : index
    %c0_30 = arith.constant 0 : index
    %63 = vector.load %arg7[%c0_29, %c6, %c0_30] : memref<4x8x32xf32, #tpu.memory_space<vmem>>, vector<4x1x32xf32>
    %64 = vector.shape_cast %63 : vector<4x1x32xf32> to vector<4x32xf32>
    %65 = vector.shape_cast %62 : vector<4x32xf32> to vector<4x1x32xf32>
    tpu.vector_store %arg7[%c0_29, %c6, %c0_30], %65 {strides = array<i32>} : memref<4x8x32xf32, #tpu.memory_space<vmem>>, vector<4x1x32xf32>,
    %cst_31 = arith.constant dense<0.000000e+00> : vector<4x32xf32>
    %66 = tpu.matmul %62, %8, %cst_31 {dimension_numbers = #tpu.dot_dimension_numbers<[1], [0], [0], [1], [0, 0, 1, 1], [], []>} : vector<4x32xf32>, vector<32x32xf32>, vector<4x32xf32> -> vector<4x32xf32>
    %67 = vector.extract_strided_slice %7 {offsets = [0, 7, 0], sizes = [4, 1, 32], strides = [1, 1, 1]} : vector<4x8x32xf32> to vector<4x1x32xf32>
    %68 = vector.shape_cast %67 : vector<4x1x32xf32> to vector<4x32xf32>
    %69 = arith.addf %66, %68 : vector<4x32xf32>
    %70 = math.tanh %69 : vector<4x32xf32>
    %c0_32 = arith.constant 0 : index
    %c7 = arith.constant 7 : index
    %c0_33 = arith.constant 0 : index
    %71 = vector.load %arg7[%c0_32, %c7, %c0_33] : memref<4x8x32xf32, #tpu.memory_space<vmem>>, vector<4x1x32xf32>
    %72 = vector.shape_cast %71 : vector<4x1x32xf32> to vector<4x32xf32>
    %73 = vector.shape_cast %70 : vector<4x32xf32> to vector<4x1x32xf32>
    tpu.vector_store %arg7[%c0_32, %c7, %c0_33], %73 {strides = array<i32>} : memref<4x8x32xf32, #tpu.memory_space<vmem>>, vector<4x1x32xf32>,
    %c0_34 = arith.constant 0 : index
    %c0_35 = arith.constant 0 : index
    %c0_36 = arith.constant 0 : index
    %74 = vector.load %arg7[%c0_34, %c0_35, %c0_36] : memref<4x8x32xf32, #tpu.memory_space<vmem>>, vector<4x8x32xf32>
    %75 = vector.shape_cast %74 : vector<4x8x32xf32> to vector<32x32xf32>
    %c0_37 = arith.constant 0 : index
    %c0_38 = arith.constant 0 : index
    %76 = vector.load %arg4[%c0_37, %c0_38] : memref<32x8xf32, #tpu.memory_space<vmem>>, vector<32x8xf32>
    %cst_39 = arith.constant dense<0.000000e+00> : vector<32x8xf32>
    %77 = tpu.matmul %75, %76, %cst_39 {dimension_numbers = #tpu.dot_dimension_numbers<[1], [0], [0], [1], [0, 0, 1, 1], [], []>} : vector<32x32xf32>, vector<32x8xf32>, vector<32x8xf32> -> vector<32x8xf32>
    %c0_40 = arith.constant 0 : index
    %c0_41 = arith.constant 0 : index
    %78 = vector.load %arg5[%c0_40, %c0_41] : memref<1x8xf32, #tpu.memory_space<vmem>>, vector<1x8xf32>
    %79 = vector.broadcast %78 : vector<1x8xf32> to vector<32x8xf32>
    %80 = arith.addf %77, %79 : vector<32x8xf32>
    %81 = vector.shape_cast %80 : vector<32x8xf32> to vector<4x8x8xf32>
    %c0_42 = arith.constant 0 : index
    %c0_43 = arith.constant 0 : index
    %c0_44 = arith.constant 0 : index
    %82 = vector.load %arg6[%c0_42, %c0_43, %c0_44] : memref<4x8x8xf32, #tpu.memory_space<vmem>>, vector<4x8x8xf32>
    tpu.vector_store %arg6[%c0_42, %c0_43, %c0_44], %81 {strides = array<i32>} : memref<4x8x8xf32, #tpu.memory_space<vmem>>, vector<4x8x8xf32>,
    return
  }
}

</mosaic_0001>

<llo_original>
// kernel: tpu_custom_call.1
$region0: #{tpu_custom_call.1}
  #allocation0 [shape = 'u32[]', space=smem, size = 0x4, offset = 0x4, fixed_abs, tag = 'smem constant byte address 0x4 - core index']
  #allocation1 [shape = 'u32[144,128]{1,0:T(1,128)}', space=vmem, size = 0x12000, scoped, tag = 'internal scratch']
  #allocation2 [shape = 'f32[4,8,32]{2,1,0:T(8,128)}', space=vmem, size = 0x4000, scoped, tag = 'scratch operand']
  %s0 = inlined_call_operand.vmem [shape: f32[4,8,16], index: 0, kind: input, shape index: {}]
  %s1 = inlined_call_operand.hbm [shape: f32[32,32], index: 1, kind: input, shape index: {}]
  %s2 = inlined_call_operand.hbm [shape: f32[16,32], index: 2, kind: input, shape index: {}]
  %s3 = inlined_call_operand.vmem [shape: f32[1,32], index: 3, kind: input, shape index: {}]
  %s4 = inlined_call_operand.vmem [shape: f32[32,8], index: 4, kind: input, shape index: {}]
  %s5 = inlined_call_operand.vmem [shape: f32[1,8], index: 5, kind: input, shape index: {}]
  %s6 = inlined_call_operand.hbm [shape: f32[4,8,8], index: 6, kind: output, shape index: {}]
  %s7 = sld [smem:[#allocation0]]
  $region42: #{tpu_custom_call.1} parent=0
    _
  %s9 = ssub.s32 1, %s7
  %s10 = scalar_select 0, %s9, %s7
  $region1: #{tpu_custom_call.1} parent=0
    #allocation3 [shape = 'u8[16384]{0}', space=vmem, size = 0x4000, scoped, tag = 'input window, operand 1, single buffered']
    #allocation4 [shape = 's32[1]{0}', space=sflag, size = 0x4, scoped, tag = 'scoped memory for tpu_custom_call.1']
    #allocation5 [shape = 's32[1]{0}', space=sflag, size = 0x4, scoped, tag = 'scoped memory for tpu_custom_call.1']
    #allocation6 [shape = 'u8[8192]{0}', space=vmem, size = 0x2000, scoped, tag = 'input window, operand 2, single buffered']
    #allocation7 [shape = 's32[1]{0}', space=sflag, size = 0x4, scoped, tag = 'scoped memory for tpu_custom_call.1']
    #allocation8 [shape = 'u8[16384]{0}', space=vmem, size = 0x4000, scoped, tag = 'output window, operand 0, single buffered']
    %11 = vsyncpa [#allocation4], 0
    %12 = vsyncpa [#allocation7], 0
    %13 = vsyncpa [#allocation5], 0
    // Predicated region
    $region2: #{tpu_custom_call.1} parent=1 // pred_check
      _
    $region3: #{tpu_custom_call.1} parent=1 // pred_check_branch
      %15 = sbr.rel (0) target = $region5
    $region4: #{tpu_custom_call.1} parent=1 // pred_region
      _
    $region5: #{tpu_custom_call.1} parent=1 // pred_fallthru
      _
    // Predicated region
    $region6: #{tpu_custom_call.1} parent=1 // pred_check
      _
    $region7: #{tpu_custom_call.1} parent=1 // pred_check_branch
      %17 = sbr.rel (0) target = $region9
    $region8: #{tpu_custom_call.1} parent=1 // pred_region
      %s19 = ssub.s32 512, 512
      %20 = vsyncadd [#allocation4], %s19
      %s21 = sshll.u32 [#allocation3], 4
      %s22 = int_to_ptr.vmem [resolvable:$true] %s21
      %27 = dma.hbm_to_vmem [thread:$0]  %s1, 512, %s22, [#allocation4], 128, 128, 8
    $region9: #{tpu_custom_call.1} parent=1 // pred_fallthru
      _
    // Predicated region
    $region10: #{tpu_custom_call.1} parent=1 // pred_check
      _
    $region11: #{tpu_custom_call.1} parent=1 // pred_check_branch
      %29 = sbr.rel (0) target = $region13
    $region12: #{tpu_custom_call.1} parent=1 // pred_region
      %s31 = ssub.s32 256, 256
      %32 = vsyncadd [#allocation7], %s31
      %s33 = sshll.u32 [#allocation6], 4
      %s34 = int_to_ptr.vmem [resolvable:$true] %s33
      %39 = dma.hbm_to_vmem [thread:$0]  %s2, 256, %s34, [#allocation7], 128, 128, 8
    $region13: #{tpu_custom_call.1} parent=1 // pred_fallthru
      _
    // Predicated region
    $region14: #{tpu_custom_call.1} parent=1 // pred_check
      _
    $region15: #{tpu_custom_call.1} parent=1 // pred_check_branch
      %41 = sbr.rel (0) target = $region17
    $region16: #{tpu_custom_call.1} parent=1 // pred_region
      _
    $region17: #{tpu_custom_call.1} parent=1 // pred_fallthru
      _
    // Predicated region
    $region18: #{tpu_custom_call.1} parent=1 // pred_check
      _
    $region19: #{tpu_custom_call.1} parent=1 // pred_check_branch
      %43 = sbr.rel (0) target = $region21
    $region20: #{tpu_custom_call.1} parent=1 // pred_region
      _
    $region21: #{tpu_custom_call.1} parent=1 // pred_fallthru
      _
    // Predicated region
    $region22: #{tpu_custom_call.1} parent=1 // pred_check
      _
    $region23: #{tpu_custom_call.1} parent=1 // pred_check_branch
      %45 = sbr.rel (0) target = $region25
    $region24: #{tpu_custom_call.1} parent=1 // pred_region
      _
    $region25: #{tpu_custom_call.1} parent=1 // pred_fallthru
      _
    // Predicated region
    $region26: #{tpu_custom_call.1} parent=1 // pred_check
      _
    $region27: #{tpu_custom_call.1} parent=1 // pred_check_branch
      %47 = sbr.rel (0) target = $region29
    $region28: #{tpu_custom_call.1} parent=1 // pred_region
      %48 = dma.done [#allocation4], 512
    $region29: #{tpu_custom_call.1} parent=1 // pred_fallthru
      _
    // Predicated region
    $region30: #{tpu_custom_call.1} parent=1 // pred_check
      _
    $region31: #{tpu_custom_call.1} parent=1 // pred_check_branch
      %50 = sbr.rel (0) target = $region33
    $region32: #{tpu_custom_call.1} parent=1 // pred_region
      %51 = dma.done [#allocation7], 256
    $region33: #{tpu_custom_call.1} parent=1 // pred_fallthru
      _
    %v52 = vld [vmem:[%s0] sm:$0xff]
    %v53 = vld [vmem:[%s0 + $0x8] sm:$0xff]
    %v54 = vld [vmem:[%s0 + $0x10] sm:$0xff]
    %v55 = vld [vmem:[%s0 + $0x18] sm:$0xff]
    %v56 = vld [vmem:[#allocation6] sm:$0xff]
    %v57 = vld [vmem:[#allocation6 + $0x8] sm:$0xff]
    %v58 = vld [vmem:[%s3] sm:$0x1]
    %v60 = vlaneseq
    %v61 = vshrl.u32 %v60, 7
    %v62 = vsub.s32 0, %v61
    %v63 = vrot.slane %v58, %v62
    %vm65 = vcmask 130048
    %v67 = vsel %vm65, %v52, 0
    %v70 = vsel %vm65, %v53, 0
    %v73 = vsel %vm65, %v54, 0
    %v76 = vsel %vm65, %v55, 0
    %78 = vmatprep.subr.mxu0 0.0
    %79 = vmatpush1.msra.mxu0 0.0
    %80 = vmatprep.subr.mxu0 0.0
    %81 = vmatpush1.msra.mxu0 0.0
    %82 = vmatprep.subr.mxu0 0.0
    %83 = vmatpush1.msra.mxu0 0.0
    %84 = vmatprep.subr.mxu0 0.0
    %85 = vmatpush1.msra.mxu0 0.0
    %86 = vmatprep.subr.mxu0 0.0
    %87 = vmatpush1.msra.mxu0 0.0
    %88 = vmatprep.subr.mxu0 0.0
    %89 = vmatpush1.msra.mxu0 0.0
    %90 = vmatprep.subr.mxu0 0.0
    %91 = vmatpush1.msra.mxu0 0.0
    %92 = vmatprep.subr.mxu0 0.0
    %93 = vmatpush1.msra.mxu0 0.0
    %94 = vmatprep.subr.mxu0 0.0
    %95 = vmatpush1.msra.mxu0 0.0
    %96 = vmatprep.subr.mxu0 0.0
    %97 = vmatpush1.msra.mxu0 0.0
    %98 = vmatprep.subr.mxu0 0.0
    %99 = vmatpush1.msra.mxu0 0.0
    %100 = vmatprep.subr.mxu0 0.0
    %101 = vmatpush1.msra.mxu0 0.0
    %102 = vmatprep.subr.mxu0 0.0
    %103 = vmatpush1.msra.mxu0 0.0
    %104 = vmatprep.subr.mxu0 0.0
    %105 = vmatpush1.msra.mxu0 0.0
    %106 = vmatprep.subr.mxu0 0.0
    %107 = vmatpush1.msra.mxu0 %v57
    %108 = vmatprep.subr.mxu0 0.0
    %109 = vmatpush1.msra.mxu0 %v56
    %110 = vmatprep.subr.mxu0 0.0
    %111 = vmatpush2.msra.mxu0 0.0
    %112 = vmatprep.subr.mxu0 0.0
    %113 = vmatpush2.msra.mxu0 0.0
    %114 = vmatprep.subr.mxu0 0.0
    %115 = vmatpush2.msra.mxu0 0.0
    %116 = vmatprep.subr.mxu0 0.0
    %117 = vmatpush2.msra.mxu0 0.0
    %118 = vmatprep.subr.mxu0 0.0
    %119 = vmatpush2.msra.mxu0 0.0
    %120 = vmatprep.subr.mxu0 0.0
    %121 = vmatpush2.msra.mxu0 0.0
    %122 = vmatprep.subr.mxu0 0.0
    %123 = vmatpush2.msra.mxu0 0.0
    %124 = vmatprep.subr.mxu0 0.0
    %125 = vmatpush2.msra.mxu0 0.0
    %126 = vmatprep.subr.mxu0 0.0
    %127 = vmatpush2.msra.mxu0 0.0
    %128 = vmatprep.subr.mxu0 0.0
    %129 = vmatpush2.msra.mxu0 0.0
    %130 = vmatprep.subr.mxu0 0.0
    %131 = vmatpush2.msra.mxu0 0.0
    %132 = vmatprep.subr.mxu0 0.0
    %133 = vmatpush2.msra.mxu0 0.0
    %134 = vmatprep.subr.mxu0 0.0
    %135 = vmatpush2.msra.mxu0 0.0
    %136 = vmatprep.subr.mxu0 0.0
    %137 = vmatpush2.msra.mxu0 0.0
    %138 = vmatprep.subr.mxu0 0.0
    %139 = vmatpush2.msra.mxu0 0.0
    %140 = vmatprep.subr.mxu0 0.0
    %141 = vmatpush2.msra.mxu0 0.0
    %142 = vmatprep.mubr.f32.mxu0 0.0
    %143 = vmatmul.mubr.f32.gmra.mxu0 %v67
    %v144 = vpop.f32.mrf.mxu0
    %v145 = vadd.f32 %v63, %v144
    %v146 = vpop.f32.mrf.mxu0
    %147 = vmatprep.mubr.f32.mxu0 0.0
    %148 = vmatmul.mubr.f32.gmra.mxu0 %v70
    %v149 = vpop.f32.mrf.mxu0
    %v150 = vadd.f32 %v63, %v149
    %v151 = vpop.f32.mrf.mxu0
    %152 = vmatprep.mubr.f32.mxu0 0.0
    %153 = vmatmul.mubr.f32.gmra.mxu0 %v73
    %v154 = vpop.f32.mrf.mxu0
    %v155 = vadd.f32 %v63, %v154
    %v156 = vpop.f32.mrf.mxu0
    %157 = vmatprep.mubr.f32.mxu0 0.0
    %158 = vmatmul.mubr.f32.gmra.mxu0 %v76
    %v159 = vpop.f32.mrf.mxu0
    %v160 = vadd.f32 %v63, %v159
    %v161 = vpop.f32.mrf.mxu0
    %162 = vdwg.mxu0
    %v163 = vld [vmem:[#allocation3] sm:$0xff]
    %v164 = vld [vmem:[#allocation3 + $0x8] sm:$0xff]
    %v165 = vld [vmem:[#allocation3 + $0x10] sm:$0xff]
    %v166 = vld [vmem:[#allocation3 + $0x18] sm:$0xff]
    %v171 = vrot.slane %v150, 7
    %vm172 = vcmask 1041409
    %v173 = vsel %vm172, %v171, %v145
    %v174 = vrot.slane %v155, 6
    %vm175 = vcmask 1042434
    %v176 = vsel %vm175, %v174, %v173
    %v177 = vrot.slane %v160, 5
    %vm178 = vcmask 1043459
    %v179 = vsel %vm178, %v177, %v176
    %vm181 = vcmask 261120
    %v183 = vsel %vm181, 0.0, 0
    %185 = vmatprep.subr.mxu0 0.0
    %186 = vmatpush1.msra.mxu0 0.0
    %187 = vmatprep.subr.mxu0 0.0
    %188 = vmatpush1.msra.mxu0 0.0
    %189 = vmatprep.subr.mxu0 0.0
    %190 = vmatpush1.msra.mxu0 0.0
    %191 = vmatprep.subr.mxu0 0.0
    %192 = vmatpush1.msra.mxu0 0.0
    %193 = vmatprep.subr.mxu0 0.0
    %194 = vmatpush1.msra.mxu0 0.0
    %195 = vmatprep.subr.mxu0 0.0
    %196 = vmatpush1.msra.mxu0 0.0
    %197 = vmatprep.subr.mxu0 0.0
    %198 = vmatpush1.msra.mxu0 0.0
    %199 = vmatprep.subr.mxu0 0.0
    %200 = vmatpush1.msra.mxu0 0.0
    %201 = vmatprep.subr.mxu0 0.0
    %202 = vmatpush1.msra.mxu0 0.0
    %203 = vmatprep.subr.mxu0 0.0
    %204 = vmatpush1.msra.mxu0 0.0
    %205 = vmatprep.subr.mxu0 0.0
    %206 = vmatpush1.msra.mxu0 0.0
    %207 = vmatprep.subr.mxu0 0.0
    %208 = vmatpush1.msra.mxu0 0.0
    %209 = vmatprep.subr.mxu0 0.0
    %210 = vmatpush1.msra.mxu0 %v166
    %211 = vmatprep.subr.mxu0 0.0
    %212 = vmatpush1.msra.mxu0 %v165
    %213 = vmatprep.subr.mxu0 0.0
    %214 = vmatpush1.msra.mxu0 %v164
    %215 = vmatprep.subr.mxu0 0.0
    %216 = vmatpush1.msra.mxu0 %v163
    %217 = vmatprep.subr.mxu0 0.0
    %218 = vmatpush2.msra.mxu0 0.0
    %219 = vmatprep.subr.mxu0 0.0
    %220 = vmatpush2.msra.mxu0 0.0
    %221 = vmatprep.subr.mxu0 0.0
    %222 = vmatpush2.msra.mxu0 0.0
    %223 = vmatprep.subr.mxu0 0.0
    %224 = vmatpush2.msra.mxu0 0.0
    %225 = vmatprep.subr.mxu0 0.0
    %226 = vmatpush2.msra.mxu0 0.0
    %227 = vmatprep.subr.mxu0 0.0
    %228 = vmatpush2.msra.mxu0 0.0
    %229 = vmatprep.subr.mxu0 0.0
    %230 = vmatpush2.msra.mxu0 0.0
    %231 = vmatprep.subr.mxu0 0.0
    %232 = vmatpush2.msra.mxu0 0.0
    %233 = vmatprep.subr.mxu0 0.0
    %234 = vmatpush2.msra.mxu0 0.0
    %235 = vmatprep.subr.mxu0 0.0
    %236 = vmatpush2.msra.mxu0 0.0
    %237 = vmatprep.subr.mxu0 0.0
    %238 = vmatpush2.msra.mxu0 0.0
    %239 = vmatprep.subr.mxu0 0.0
    %240 = vmatpush2.msra.mxu0 0.0
    %241 = vmatprep.subr.mxu0 0.0
    %242 = vmatpush2.msra.mxu0 0.0
    %243 = vmatprep.subr.mxu0 0.0
    %244 = vmatpush2.msra.mxu0 0.0
    %245 = vmatprep.subr.mxu0 0.0
    %246 = vmatpush2.msra.mxu0 0.0
    %247 = vmatprep.subr.mxu0 0.0
    %248 = vmatpush2.msra.mxu0 0.0
    %249 = vmatprep.mubr.f32.mxu0 0.0
    %250 = vmatmul.mubr.f32.gmra.mxu0 %v183
    %v251 = vpop.f32.mrf.mxu0
    %v252 = vadd.f32 %v179, %v251
    %v253 = vpop.f32.mrf.mxu0
    %254 = vdwg.mxu0
    %v255 = vtanh.pop %v252
    %v258 = vunpack.c.l.s4 1966171168
    %v259 = vunpack.c.0.s8 %v258
    %v260 = vlaneseq
    %v261 = vshrl.u32 %v260, 7
    %v262 = vsub.s32 %v259, %v261
    %v263 = vrot.slane %v255, %v262
    %v264 = vcombine.high %v263, %v263
    %v266 = vunpack.c.l.s4 1966171168
    %v267 = vunpack.c.0.s8 %v266
    %v268 = vlaneseq
    %v269 = vshrl.u32 %v268, 7
    %v270 = vsub.s32 %v267, %v269
    %v271 = vrot.slane %v263, %v270
    %v273 = vunpack.c.l.s4 1966171168
    %v274 = vunpack.c.0.s8 %v273
    %v275 = vlaneseq
    %v276 = vshrl.u32 %v275, 7
    %v277 = vsub.s32 %v274, %v276
    %v278 = vrot.slane %v264, %v277
    %v279 = vcombine.high %v271, %v271
    %v280 = vcombine.high %v278, %v278
    %vm285 = vcmask 253952
    %286 = vst.msk [vmem:[#allocation2] sm:$0x1] %vm285, %v271
    %287 = vst.msk [vmem:[#allocation2 + $0x8] sm:$0x1] %vm285, %v278
    %288 = vst.msk [vmem:[#allocation2 + $0x10] sm:$0x1] %vm285, %v279
    %289 = vst.msk [vmem:[#allocation2 + $0x18] sm:$0x1] %vm285, %v280
    %v290 = vrot.slane %v145, 1
    %v291 = vsel %vm172, %v150, %v290
    %v292 = vrot.slane %v155, 7
    %v293 = vsel %vm175, %v292, %v291
    %v294 = vrot.slane %v160, 6
    %v295 = vsel %vm178, %v294, %v293
    %v297 = vsel %vm181, %v255, 0
    %299 = vmatprep.subr.mxu0 0.0
    %300 = vmatpush1.msra.mxu0 0.0
    %301 = vmatprep.subr.mxu0 0.0
    %302 = vmatpush1.msra.mxu0 0.0
    %303 = vmatprep.subr.mxu0 0.0
    %304 = vmatpush1.msra.mxu0 0.0
    %305 = vmatprep.subr.mxu0 0.0
    %306 = vmatpush1.msra.mxu0 0.0
    %307 = vmatprep.subr.mxu0 0.0
    %308 = vmatpush1.msra.mxu0 0.0
    %309 = vmatprep.subr.mxu0 0.0
    %310 = vmatpush1.msra.mxu0 0.0
    %311 = vmatprep.subr.mxu0 0.0
    %312 = vmatpush1.msra.mxu0 0.0
    %313 = vmatprep.subr.mxu0 0.0
    %314 = vmatpush1.msra.mxu0 0.0
    %315 = vmatprep.subr.mxu0 0.0
    %316 = vmatpush1.msra.mxu0 0.0
    %317 = vmatprep.subr.mxu0 0.0
    %318 = vmatpush1.msra.mxu0 0.0
    %319 = vmatprep.subr.mxu0 0.0
    %320 = vmatpush1.msra.mxu0 0.0
    %321 = vmatprep.subr.mxu0 0.0
    %322 = vmatpush1.msra.mxu0 0.0
    %323 = vmatprep.subr.mxu0 0.0
    %324 = vmatpush1.msra.mxu0 %v166
    %325 = vmatprep.subr.mxu0 0.0
    %326 = vmatpush1.msra.mxu0 %v165
    %327 = vmatprep.subr.mxu0 0.0
    %328 = vmatpush1.msra.mxu0 %v164
    %329 = vmatprep.subr.mxu0 0.0
    %330 = vmatpush1.msra.mxu0 %v163
    %331 = vmatprep.subr.mxu0 0.0
    %332 = vmatpush2.msra.mxu0 0.0
    %333 = vmatprep.subr.mxu0 0.0
    %334 = vmatpush2.msra.mxu0 0.0
    %335 = vmatprep.subr.mxu0 0.0
    %336 = vmatpush2.msra.mxu0 0.0
    %337 = vmatprep.subr.mxu0 0.0
    %338 = vmatpush2.msra.mxu0 0.0
    %339 = vmatprep.subr.mxu0 0.0
    %340 = vmatpush2.msra.mxu0 0.0
    %341 = vmatprep.subr.mxu0 0.0
    %342 = vmatpush2.msra.mxu0 0.0
    %343 = vmatprep.subr.mxu0 0.0
    %344 = vmatpush2.msra.mxu0 0.0
    %345 = vmatprep.subr.mxu0 0.0
    %346 = vmatpush2.msra.mxu0 0.0
    %347 = vmatprep.subr.mxu0 0.0
    %348 = vmatpush2.msra.mxu0 0.0
    %349 = vmatprep.subr.mxu0 0.0
    %350 = vmatpush2.msra.mxu0 0.0
    %351 = vmatprep.subr.mxu0 0.0
    %352 = vmatpush2.msra.mxu0 0.0
    %353 = vmatprep.subr.mxu0 0.0
    %354 = vmatpush2.msra.mxu0 0.0
    %355 = vmatprep.subr.mxu0 0.0
    %356 = vmatpush2.msra.mxu0 0.0
    %357 = vmatprep.subr.mxu0 0.0
    %358 = vmatpush2.msra.mxu0 0.0
    %359 = vmatprep.subr.mxu0 0.0
    %360 = vmatpush2.msra.mxu0 0.0
    %361 = vmatprep.subr.mxu0 0.0
    %362 = vmatpush2.msra.mxu0 0.0
    %363 = vmatprep.mubr.f32.mxu0 0.0
    %364 = vmatmul.mubr.f32.gmra.mxu0 %v297
    %v365 = vpop.f32.mrf.mxu0
    %v366 = vadd.f32 %v295, %v365
    %v367 = vpop.f32.mrf.mxu0
    %368 = vdwg.mxu0
    %v369 = vtanh.pop %v366
    %v372 = vunpack.c.l.s4 1966171168
    %v373 = vunpack.c.0.s8 %v372
    %v374 = vlaneseq
    %v375 = vshrl.u32 %v374, 7
    %v376 = vsub.s32 %v373, %v375
    %v377 = vrot.slane %v369, %v376
    %v378 = vcombine.high %v377, %v377
    %v380 = vunpack.c.l.s4 1966171168
    %v381 = vunpack.c.0.s8 %v380
    %v382 = vlaneseq
    %v383 = vshrl.u32 %v382, 7
    %v384 = vsub.s32 %v381, %v383
    %v385 = vrot.slane %v377, %v384
    %v387 = vunpack.c.l.s4 1966171168
    %v388 = vunpack.c.0.s8 %v387
    %v389 = vlaneseq
    %v390 = vshrl.u32 %v389, 7
    %v391 = vsub.s32 %v388, %v390
    %v392 = vrot.slane %v378, %v391
    %v393 = vcombine.high %v385, %v385
    %v394 = vcombine.high %v392, %v392
    %399 = vst.msk [vmem:[#allocation2 + $0x1] sm:$0x1] %vm285, %v385
    %400 = vst.msk [vmem:[#allocation2 + $0x9] sm:$0x1] %vm285, %v392
    %401 = vst.msk [vmem:[#allocation2 + $0x11] sm:$0x1] %vm285, %v393
    %402 = vst.msk [vmem:[#allocation2 + $0x19] sm:$0x1] %vm285, %v394
    %v403 = vrot.slane %v145, 2
    %v404 = vrot.slane %v150, 1
    %v405 = vsel %vm172, %v404, %v403
    %v406 = vsel %vm175, %v155, %v405
    %v407 = vrot.slane %v160, 7
    %v408 = vsel %vm178, %v407, %v406
    %v410 = vsel %vm181, %v369, 0
    %412 = vmatprep.subr.mxu0 0.0
    %413 = vmatpush1.msra.mxu0 0.0
    %414 = vmatprep.subr.mxu0 0.0
    %415 = vmatpush1.msra.mxu0 0.0
    %416 = vmatprep.subr.mxu0 0.0
    %417 = vmatpush1.msra.mxu0 0.0
    %418 = vmatprep.subr.mxu0 0.0
    %419 = vmatpush1.msra.mxu0 0.0
    %420 = vmatprep.subr.mxu0 0.0
    %421 = vmatpush1.msra.mxu0 0.0
    %422 = vmatprep.subr.mxu0 0.0
    %423 = vmatpush1.msra.mxu0 0.0
    %424 = vmatprep.subr.mxu0 0.0
    %425 = vmatpush1.msra.mxu0 0.0
    %426 = vmatprep.subr.mxu0 0.0
    %427 = vmatpush1.msra.mxu0 0.0
    %428 = vmatprep.subr.mxu0 0.0
    %429 = vmatpush1.msra.mxu0 0.0
    %430 = vmatprep.subr.mxu0 0.0
    %431 = vmatpush1.msra.mxu0 0.0
    %432 = vmatprep.subr.mxu0 0.0
    %433 = vmatpush1.msra.mxu0 0.0
    %434 = vmatprep.subr.mxu0 0.0
    %435 = vmatpush1.msra.mxu0 0.0
    %436 = vmatprep.subr.mxu0 0.0
    %437 = vmatpush1.msra.mxu0 %v166
    %438 = vmatprep.subr.mxu0 0.0
    %439 = vmatpush1.msra.mxu0 %v165
    %440 = vmatprep.subr.mxu0 0.0
    %441 = vmatpush1.msra.mxu0 %v164
    %442 = vmatprep.subr.mxu0 0.0
    %443 = vmatpush1.msra.mxu0 %v163
    %444 = vmatprep.subr.mxu0 0.0
    %445 = vmatpush2.msra.mxu0 0.0
    %446 = vmatprep.subr.mxu0 0.0
    %447 = vmatpush2.msra.mxu0 0.0
    %448 = vmatprep.subr.mxu0 0.0
    %449 = vmatpush2.msra.mxu0 0.0
    %450 = vmatprep.subr.mxu0 0.0
    %451 = vmatpush2.msra.mxu0 0.0
    %452 = vmatprep.subr.mxu0 0.0
    %453 = vmatpush2.msra.mxu0 0.0
    %454 = vmatprep.subr.mxu0 0.0
    %455 = vmatpush2.msra.mxu0 0.0
    %456 = vmatprep.subr.mxu0 0.0
    %457 = vmatpush2.msra.mxu0 0.0
    %458 = vmatprep.subr.mxu0 0.0
    %459 = vmatpush2.msra.mxu0 0.0
    %460 = vmatprep.subr.mxu0 0.0
    %461 = vmatpush2.msra.mxu0 0.0
    %462 = vmatprep.subr.mxu0 0.0
    %463 = vmatpush2.msra.mxu0 0.0
    %464 = vmatprep.subr.mxu0 0.0
    %465 = vmatpush2.msra.mxu0 0.0
    %466 = vmatprep.subr.mxu0 0.0
    %467 = vmatpush2.msra.mxu0 0.0
    %468 = vmatprep.subr.mxu0 0.0
    %469 = vmatpush2.msra.mxu0 0.0
    %470 = vmatprep.subr.mxu0 0.0
    %471 = vmatpush2.msra.mxu0 0.0
    %472 = vmatprep.subr.mxu0 0.0
    %473 = vmatpush2.msra.mxu0 0.0
    %474 = vmatprep.subr.mxu0 0.0
    %475 = vmatpush2.msra.mxu0 0.0
    %476 = vmatprep.mubr.f32.mxu0 0.0
    %477 = vmatmul.mubr.f32.gmra.mxu0 %v410
    %v478 = vpop.f32.mrf.mxu0
    %v479 = vadd.f32 %v408, %v478
    %v480 = vpop.f32.mrf.mxu0
    %481 = vdwg.mxu0
    %v482 = vtanh.pop %v479
    %v485 = vunpack.c.l.s4 1966171168
    %v486 = vunpack.c.0.s8 %v485
    %v487 = vlaneseq
    %v488 = vshrl.u32 %v487, 7
    %v489 = vsub.s32 %v486, %v488
    %v490 = vrot.slane %v482, %v489
    %v491 = vcombine.high %v490, %v490
    %v493 = vunpack.c.l.s4 1966171168
    %v494 = vunpack.c.0.s8 %v493
    %v495 = vlaneseq
    %v496 = vshrl.u32 %v495, 7
    %v497 = vsub.s32 %v494, %v496
    %v498 = vrot.slane %v490, %v497
    %v500 = vunpack.c.l.s4 1966171168
    %v501 = vunpack.c.0.s8 %v500
    %v502 = vlaneseq
    %v503 = vshrl.u32 %v502, 7
    %v504 = vsub.s32 %v501, %v503
    %v505 = vrot.slane %v491, %v504
    %v506 = vcombine.high %v498, %v498
    %v507 = vcombine.high %v505, %v505
    %512 = vst.msk [vmem:[#allocation2 + $0x2] sm:$0x1] %vm285, %v498
    %513 = vst.msk [vmem:[#allocation2 + $0xa] sm:$0x1] %vm285, %v505
    %514 = vst.msk [vmem:[#allocation2 + $0x12] sm:$0x1] %vm285, %v506
    %515 = vst.msk [vmem:[#allocation2 + $0x1a] sm:$0x1] %vm285, %v507
    %v516 = vrot.slane %v145, 3
    %v517 = vrot.slane %v150, 2
    %v518 = vsel %vm172, %v517, %v516
    %v519 = vrot.slane %v155, 1
    %v520 = vsel %vm175, %v519, %v518
    %v521 = vsel %vm178, %v160, %v520
    %v523 = vsel %vm181, %v482, 0
    %525 = vmatprep.subr.mxu0 0.0
    %526 = vmatpush1.msra.mxu0 0.0
    %527 = vmatprep.subr.mxu0 0.0
    %528 = vmatpush1.msra.mxu0 0.0
    %529 = vmatprep.subr.mxu0 0.0
    %530 = vmatpush1.msra.mxu0 0.0
    %531 = vmatprep.subr.mxu0 0.0
    %532 = vmatpush1.msra.mxu0 0.0
    %533 = vmatprep.subr.mxu0 0.0
    %534 = vmatpush1.msra.mxu0 0.0
    %535 = vmatprep.subr.mxu0 0.0
    %536 = vmatpush1.msra.mxu0 0.0
    %537 = vmatprep.subr.mxu0 0.0
    %538 = vmatpush1.msra.mxu0 0.0
    %539 = vmatprep.subr.mxu0 0.0
    %540 = vmatpush1.msra.mxu0 0.0
    %541 = vmatprep.subr.mxu0 0.0
    %542 = vmatpush1.msra.mxu0 0.0
    %543 = vmatprep.subr.mxu0 0.0
    %544 = vmatpush1.msra.mxu0 0.0
    %545 = vmatprep.subr.mxu0 0.0
    %546 = vmatpush1.msra.mxu0 0.0
    %547 = vmatprep.subr.mxu0 0.0
    %548 = vmatpush1.msra.mxu0 0.0
    %549 = vmatprep.subr.mxu0 0.0
    %550 = vmatpush1.msra.mxu0 %v166
    %551 = vmatprep.subr.mxu0 0.0
    %552 = vmatpush1.msra.mxu0 %v165
    %553 = vmatprep.subr.mxu0 0.0
    %554 = vmatpush1.msra.mxu0 %v164
    %555 = vmatprep.subr.mxu0 0.0
    %556 = vmatpush1.msra.mxu0 %v163
    %557 = vmatprep.subr.mxu0 0.0
    %558 = vmatpush2.msra.mxu0 0.0
    %559 = vmatprep.subr.mxu0 0.0
    %560 = vmatpush2.msra.mxu0 0.0
    %561 = vmatprep.subr.mxu0 0.0
    %562 = vmatpush2.msra.mxu0 0.0
    %563 = vmatprep.subr.mxu0 0.0
    %564 = vmatpush2.msra.mxu0 0.0
    %565 = vmatprep.subr.mxu0 0.0
    %566 = vmatpush2.msra.mxu0 0.0
    %567 = vmatprep.subr.mxu0 0.0
    %568 = vmatpush2.msra.mxu0 0.0
    %569 = vmatprep.subr.mxu0 0.0
    %570 = vmatpush2.msra.mxu0 0.0
    %571 = vmatprep.subr.mxu0 0.0
    %572 = vmatpush2.msra.mxu0 0.0
    %573 = vmatprep.subr.mxu0 0.0
    %574 = vmatpush2.msra.mxu0 0.0
    %575 = vmatprep.subr.mxu0 0.0
    %576 = vmatpush2.msra.mxu0 0.0
    %577 = vmatprep.subr.mxu0 0.0
    %578 = vmatpush2.msra.mxu0 0.0
    %579 = vmatprep.subr.mxu0 0.0
    %580 = vmatpush2.msra.mxu0 0.0
    %581 = vmatprep.subr.mxu0 0.0
    %582 = vmatpush2.msra.mxu0 0.0
    %583 = vmatprep.subr.mxu0 0.0
    %584 = vmatpush2.msra.mxu0 0.0
    %585 = vmatprep.subr.mxu0 0.0
    %586 = vmatpush2.msra.mxu0 0.0
    %587 = vmatprep.subr.mxu0 0.0
    %588 = vmatpush2.msra.mxu0 0.0
    %589 = vmatprep.mubr.f32.mxu0 0.0
    %590 = vmatmul.mubr.f32.gmra.mxu0 %v523
    %v591 = vpop.f32.mrf.mxu0
    %v592 = vadd.f32 %v521, %v591
    %v593 = vpop.f32.mrf.mxu0
    %594 = vdwg.mxu0
    %v595 = vtanh.pop %v592
    %v598 = vunpack.c.l.s4 1966171168
    %v599 = vunpack.c.0.s8 %v598
    %v600 = vlaneseq
    %v601 = vshrl.u32 %v600, 7
    %v602 = vsub.s32 %v599, %v601
    %v603 = vrot.slane %v595, %v602
    %v604 = vcombine.high %v603, %v603
    %v606 = vunpack.c.l.s4 1966171168
    %v607 = vunpack.c.0.s8 %v606
    %v608 = vlaneseq
    %v609 = vshrl.u32 %v608, 7
    %v610 = vsub.s32 %v607, %v609
    %v611 = vrot.slane %v603, %v610
    %v613 = vunpack.c.l.s4 1966171168
    %v614 = vunpack.c.0.s8 %v613
    %v615 = vlaneseq
    %v616 = vshrl.u32 %v615, 7
    %v617 = vsub.s32 %v614, %v616
    %v618 = vrot.slane %v604, %v617
    %v619 = vcombine.high %v611, %v611
    %v620 = vcombine.high %v618, %v618
    %625 = vst.msk [vmem:[#allocation2 + $0x3] sm:$0x1] %vm285, %v611
    %626 = vst.msk [vmem:[#allocation2 + $0xb] sm:$0x1] %vm285, %v618
    %627 = vst.msk [vmem:[#allocation2 + $0x13] sm:$0x1] %vm285, %v619
    %628 = vst.msk [vmem:[#allocation2 + $0x1b] sm:$0x1] %vm285, %v620
    %v629 = vrot.slane %v145, 4
    %v630 = vrot.slane %v150, 3
    %v631 = vsel %vm172, %v630, %v629
    %v632 = vrot.slane %v155, 2
    %v633 = vsel %vm175, %v632, %v631
    %v634 = vrot.slane %v160, 1
    %v635 = vsel %vm178, %v634, %v633
    %v637 = vsel %vm181, %v595, 0
    %639 = vmatprep.subr.mxu0 0.0
    %640 = vmatpush1.msra.mxu0 0.0
    %641 = vmatprep.subr.mxu0 0.0
    %642 = vmatpush1.msra.mxu0 0.0
    %643 = vmatprep.subr.mxu0 0.0
    %644 = vmatpush1.msra.mxu0 0.0
    %645 = vmatprep.subr.mxu0 0.0
    %646 = vmatpush1.msra.mxu0 0.0
    %647 = vmatprep.subr.mxu0 0.0
    %648 = vmatpush1.msra.mxu0 0.0
    %649 = vmatprep.subr.mxu0 0.0
    %650 = vmatpush1.msra.mxu0 0.0
    %651 = vmatprep.subr.mxu0 0.0
    %652 = vmatpush1.msra.mxu0 0.0
    %653 = vmatprep.subr.mxu0 0.0
    %654 = vmatpush1.msra.mxu0 0.0
    %655 = vmatprep.subr.mxu0 0.0
    %656 = vmatpush1.msra.mxu0 0.0
    %657 = vmatprep.subr.mxu0 0.0
    %658 = vmatpush1.msra.mxu0 0.0
    %659 = vmatprep.subr.mxu0 0.0
    %660 = vmatpush1.msra.mxu0 0.0
    %661 = vmatprep.subr.mxu0 0.0
    %662 = vmatpush1.msra.mxu0 0.0
    %663 = vmatprep.subr.mxu0 0.0
    %664 = vmatpush1.msra.mxu0 %v166
    %665 = vmatprep.subr.mxu0 0.0
    %666 = vmatpush1.msra.mxu0 %v165
    %667 = vmatprep.subr.mxu0 0.0
    %668 = vmatpush1.msra.mxu0 %v164
    %669 = vmatprep.subr.mxu0 0.0
    %670 = vmatpush1.msra.mxu0 %v163
    %671 = vmatprep.subr.mxu0 0.0
    %672 = vmatpush2.msra.mxu0 0.0
    %673 = vmatprep.subr.mxu0 0.0
    %674 = vmatpush2.msra.mxu0 0.0
    %675 = vmatprep.subr.mxu0 0.0
    %676 = vmatpush2.msra.mxu0 0.0
    %677 = vmatprep.subr.mxu0 0.0
    %678 = vmatpush2.msra.mxu0 0.0
    %679 = vmatprep.subr.mxu0 0.0
    %680 = vmatpush2.msra.mxu0 0.0
    %681 = vmatprep.subr.mxu0 0.0
    %682 = vmatpush2.msra.mxu0 0.0
    %683 = vmatprep.subr.mxu0 0.0
    %684 = vmatpush2.msra.mxu0 0.0
    %685 = vmatprep.subr.mxu0 0.0
    %686 = vmatpush2.msra.mxu0 0.0
    %687 = vmatprep.subr.mxu0 0.0
    %688 = vmatpush2.msra.mxu0 0.0
    %689 = vmatprep.subr.mxu0 0.0
    %690 = vmatpush2.msra.mxu0 0.0
    %691 = vmatprep.subr.mxu0 0.0
    %692 = vmatpush2.msra.mxu0 0.0
    %693 = vmatprep.subr.mxu0 0.0
    %694 = vmatpush2.msra.mxu0 0.0
    %695 = vmatprep.subr.mxu0 0.0
    %696 = vmatpush2.msra.mxu0 0.0
    %697 = vmatprep.subr.mxu0 0.0
    %698 = vmatpush2.msra.mxu0 0.0
    %699 = vmatprep.subr.mxu0 0.0
    %700 = vmatpush2.msra.mxu0 0.0
    %701 = vmatprep.subr.mxu0 0.0
    %702 = vmatpush2.msra.mxu0 0.0
    %703 = vmatprep.mubr.f32.mxu0 0.0
    %704 = vmatmul.mubr.f32.gmra.mxu0 %v637
    %v705 = vpop.f32.mrf.mxu0
    %v706 = vadd.f32 %v635, %v705
    %v707 = vpop.f32.mrf.mxu0
    %708 = vdwg.mxu0
    %v709 = vtanh.pop %v706
    %v712 = vunpack.c.l.s4 1966171168
    %v713 = vunpack.c.0.s8 %v712
    %v714 = vlaneseq
    %v715 = vshrl.u32 %v714, 7
    %v716 = vsub.s32 %v713, %v715
    %v717 = vrot.slane %v709, %v716
    %v718 = vcombine.high %v717, %v717
    %v720 = vunpack.c.l.s4 1966171168
    %v721 = vunpack.c.0.s8 %v720
    %v722 = vlaneseq
    %v723 = vshrl.u32 %v722, 7
    %v724 = vsub.s32 %v721, %v723
    %v725 = vrot.slane %v717, %v724
    %v727 = vunpack.c.l.s4 1966171168
    %v728 = vunpack.c.0.s8 %v727
    %v729 = vlaneseq
    %v730 = vshrl.u32 %v729, 7
    %v731 = vsub.s32 %v728, %v730
    %v732 = vrot.slane %v718, %v731
    %v733 = vcombine.high %v725, %v725
    %v734 = vcombine.high %v732, %v732
    %739 = vst.msk [vmem:[#allocation2 + $0x4] sm:$0x1] %vm285, %v725
    %740 = vst.msk [vmem:[#allocation2 + $0xc] sm:$0x1] %vm285, %v732
    %741 = vst.msk [vmem:[#allocation2 + $0x14] sm:$0x1] %vm285, %v733
    %742 = vst.msk [vmem:[#allocation2 + $0x1c] sm:$0x1] %vm285, %v734
    %v743 = vrot.slane %v145, 5
    %v744 = vrot.slane %v150, 4
    %v745 = vsel %vm172, %v744, %v743
    %v746 = vrot.slane %v155, 3
    %v747 = vsel %vm175, %v746, %v745
    %v748 = vrot.slane %v160, 2
    %v749 = vsel %vm178, %v748, %v747
    %v751 = vsel %vm181, %v709, 0
    %753 = vmatprep.subr.mxu0 0.0
    %754 = vmatpush1.msra.mxu0 0.0
    %755 = vmatprep.subr.mxu0 0.0
    %756 = vmatpush1.msra.mxu0 0.0
    %757 = vmatprep.subr.mxu0 0.0
    %758 = vmatpush1.msra.mxu0 0.0
    %759 = vmatprep.subr.mxu0 0.0
    %760 = vmatpush1.msra.mxu0 0.0
    %761 = vmatprep.subr.mxu0 0.0
    %762 = vmatpush1.msra.mxu0 0.0
    %763 = vmatprep.subr.mxu0 0.0
    %764 = vmatpush1.msra.mxu0 0.0
    %765 = vmatprep.subr.mxu0 0.0
    %766 = vmatpush1.msra.mxu0 0.0
    %767 = vmatprep.subr.mxu0 0.0
    %768 = vmatpush1.msra.mxu0 0.0
    %769 = vmatprep.subr.mxu0 0.0
    %770 = vmatpush1.msra.mxu0 0.0
    %771 = vmatprep.subr.mxu0 0.0
    %772 = vmatpush1.msra.mxu0 0.0
    %773 = vmatprep.subr.mxu0 0.0
    %774 = vmatpush1.msra.mxu0 0.0
    %775 = vmatprep.subr.mxu0 0.0
    %776 = vmatpush1.msra.mxu0 0.0
    %777 = vmatprep.subr.mxu0 0.0
    %778 = vmatpush1.msra.mxu0 %v166
    %779 = vmatprep.subr.mxu0 0.0
    %780 = vmatpush1.msra.mxu0 %v165
    %781 = vmatprep.subr.mxu0 0.0
    %782 = vmatpush1.msra.mxu0 %v164
    %783 = vmatprep.subr.mxu0 0.0
    %784 = vmatpush1.msra.mxu0 %v163
    %785 = vmatprep.subr.mxu0 0.0
    %786 = vmatpush2.msra.mxu0 0.0
    %787 = vmatprep.subr.mxu0 0.0
    %788 = vmatpush2.msra.mxu0 0.0
    %789 = vmatprep.subr.mxu0 0.0
    %790 = vmatpush2.msra.mxu0 0.0
    %791 = vmatprep.subr.mxu0 0.0
    %792 = vmatpush2.msra.mxu0 0.0
    %793 = vmatprep.subr.mxu0 0.0
    %794 = vmatpush2.msra.mxu0 0.0
    %795 = vmatprep.subr.mxu0 0.0
    %796 = vmatpush2.msra.mxu0 0.0
    %797 = vmatprep.subr.mxu0 0.0
    %798 = vmatpush2.msra.mxu0 0.0
    %799 = vmatprep.subr.mxu0 0.0
    %800 = vmatpush2.msra.mxu0 0.0
    %801 = vmatprep.subr.mxu0 0.0
    %802 = vmatpush2.msra.mxu0 0.0
    %803 = vmatprep.subr.mxu0 0.0
    %804 = vmatpush2.msra.mxu0 0.0
    %805 = vmatprep.subr.mxu0 0.0
    %806 = vmatpush2.msra.mxu0 0.0
    %807 = vmatprep.subr.mxu0 0.0
    %808 = vmatpush2.msra.mxu0 0.0
    %809 = vmatprep.subr.mxu0 0.0
    %810 = vmatpush2.msra.mxu0 0.0
    %811 = vmatprep.subr.mxu0 0.0
    %812 = vmatpush2.msra.mxu0 0.0
    %813 = vmatprep.subr.mxu0 0.0
    %814 = vmatpush2.msra.mxu0 0.0
    %815 = vmatprep.subr.mxu0 0.0
    %816 = vmatpush2.msra.mxu0 0.0
    %817 = vmatprep.mubr.f32.mxu0 0.0
    %818 = vmatmul.mubr.f32.gmra.mxu0 %v751
    %v819 = vpop.f32.mrf.mxu0
    %v820 = vadd.f32 %v749, %v819
    %v821 = vpop.f32.mrf.mxu0
    %822 = vdwg.mxu0
    %v823 = vtanh.pop %v820
    %v826 = vunpack.c.l.s4 1966171168
    %v827 = vunpack.c.0.s8 %v826
    %v828 = vlaneseq
    %v829 = vshrl.u32 %v828, 7
    %v830 = vsub.s32 %v827, %v829
    %v831 = vrot.slane %v823, %v830
    %v832 = vcombine.high %v831, %v831
    %v834 = vunpack.c.l.s4 1966171168
    %v835 = vunpack.c.0.s8 %v834
    %v836 = vlaneseq
    %v837 = vshrl.u32 %v836, 7
    %v838 = vsub.s32 %v835, %v837
    %v839 = vrot.slane %v831, %v838
    %v841 = vunpack.c.l.s4 1966171168
    %v842 = vunpack.c.0.s8 %v841
    %v843 = vlaneseq
    %v844 = vshrl.u32 %v843, 7
    %v845 = vsub.s32 %v842, %v844
    %v846 = vrot.slane %v832, %v845
    %v847 = vcombine.high %v839, %v839
    %v848 = vcombine.high %v846, %v846
    %853 = vst.msk [vmem:[#allocation2 + $0x5] sm:$0x1] %vm285, %v839
    %854 = vst.msk [vmem:[#allocation2 + $0xd] sm:$0x1] %vm285, %v846
    %855 = vst.msk [vmem:[#allocation2 + $0x15] sm:$0x1] %vm285, %v847
    %856 = vst.msk [vmem:[#allocation2 + $0x1d] sm:$0x1] %vm285, %v848
    %v857 = vrot.slane %v145, 6
    %v858 = vrot.slane %v150, 5
    %v859 = vsel %vm172, %v858, %v857
    %v860 = vrot.slane %v155, 4
    %v861 = vsel %vm175, %v860, %v859
    %v862 = vrot.slane %v160, 3
    %v863 = vsel %vm178, %v862, %v861
    %v865 = vsel %vm181, %v823, 0
    %867 = vmatprep.subr.mxu0 0.0
    %868 = vmatpush1.msra.mxu0 0.0
    %869 = vmatprep.subr.mxu0 0.0
    %870 = vmatpush1.msra.mxu0 0.0
    %871 = vmatprep.subr.mxu0 0.0
    %872 = vmatpush1.msra.mxu0 0.0
    %873 = vmatprep.subr.mxu0 0.0
    %874 = vmatpush1.msra.mxu0 0.0
    %875 = vmatprep.subr.mxu0 0.0
    %876 = vmatpush1.msra.mxu0 0.0
    %877 = vmatprep.subr.mxu0 0.0
    %878 = vmatpush1.msra.mxu0 0.0
    %879 = vmatprep.subr.mxu0 0.0
    %880 = vmatpush1.msra.mxu0 0.0
    %881 = vmatprep.subr.mxu0 0.0
    %882 = vmatpush1.msra.mxu0 0.0
    %883 = vmatprep.subr.mxu0 0.0
    %884 = vmatpush1.msra.mxu0 0.0
    %885 = vmatprep.subr.mxu0 0.0
    %886 = vmatpush1.msra.mxu0 0.0
    %887 = vmatprep.subr.mxu0 0.0
    %888 = vmatpush1.msra.mxu0 0.0
    %889 = vmatprep.subr.mxu0 0.0
    %890 = vmatpush1.msra.mxu0 0.0
    %891 = vmatprep.subr.mxu0 0.0
    %892 = vmatpush1.msra.mxu0 %v166
    %893 = vmatprep.subr.mxu0 0.0
    %894 = vmatpush1.msra.mxu0 %v165
    %895 = vmatprep.subr.mxu0 0.0
    %896 = vmatpush1.msra.mxu0 %v164
    %897 = vmatprep.subr.mxu0 0.0
    %898 = vmatpush1.msra.mxu0 %v163
    %899 = vmatprep.subr.mxu0 0.0
    %900 = vmatpush2.msra.mxu0 0.0
    %901 = vmatprep.subr.mxu0 0.0
    %902 = vmatpush2.msra.mxu0 0.0
    %903 = vmatprep.subr.mxu0 0.0
    %904 = vmatpush2.msra.mxu0 0.0
    %905 = vmatprep.subr.mxu0 0.0
    %906 = vmatpush2.msra.mxu0 0.0
    %907 = vmatprep.subr.mxu0 0.0
    %908 = vmatpush2.msra.mxu0 0.0
    %909 = vmatprep.subr.mxu0 0.0
    %910 = vmatpush2.msra.mxu0 0.0
    %911 = vmatprep.subr.mxu0 0.0
    %912 = vmatpush2.msra.mxu0 0.0
    %913 = vmatprep.subr.mxu0 0.0
    %914 = vmatpush2.msra.mxu0 0.0
    %915 = vmatprep.subr.mxu0 0.0
    %916 = vmatpush2.msra.mxu0 0.0
    %917 = vmatprep.subr.mxu0 0.0
    %918 = vmatpush2.msra.mxu0 0.0
    %919 = vmatprep.subr.mxu0 0.0
    %920 = vmatpush2.msra.mxu0 0.0
    %921 = vmatprep.subr.mxu0 0.0
    %922 = vmatpush2.msra.mxu0 0.0
    %923 = vmatprep.subr.mxu0 0.0
    %924 = vmatpush2.msra.mxu0 0.0
    %925 = vmatprep.subr.mxu0 0.0
    %926 = vmatpush2.msra.mxu0 0.0
    %927 = vmatprep.subr.mxu0 0.0
    %928 = vmatpush2.msra.mxu0 0.0
    %929 = vmatprep.subr.mxu0 0.0
    %930 = vmatpush2.msra.mxu0 0.0
    %931 = vmatprep.mubr.f32.mxu0 0.0
    %932 = vmatmul.mubr.f32.gmra.mxu0 %v865
    %v933 = vpop.f32.mrf.mxu0
    %v934 = vadd.f32 %v863, %v933
    %v935 = vpop.f32.mrf.mxu0
    %936 = vdwg.mxu0
    %v937 = vtanh.pop %v934
    %v940 = vunpack.c.l.s4 1966171168
    %v941 = vunpack.c.0.s8 %v940
    %v942 = vlaneseq
    %v943 = vshrl.u32 %v942, 7
    %v944 = vsub.s32 %v941, %v943
    %v945 = vrot.slane %v937, %v944
    %v946 = vcombine.high %v945, %v945
    %v948 = vunpack.c.l.s4 1966171168
    %v949 = vunpack.c.0.s8 %v948
    %v950 = vlaneseq
    %v951 = vshrl.u32 %v950, 7
    %v952 = vsub.s32 %v949, %v951
    %v953 = vrot.slane %v945, %v952
    %v955 = vunpack.c.l.s4 1966171168
    %v956 = vunpack.c.0.s8 %v955
    %v957 = vlaneseq
    %v958 = vshrl.u32 %v957, 7
    %v959 = vsub.s32 %v956, %v958
    %v960 = vrot.slane %v946, %v959
    %v961 = vcombine.high %v953, %v953
    %v962 = vcombine.high %v960, %v960
    %967 = vst.msk [vmem:[#allocation2 + $0x6] sm:$0x1] %vm285, %v953
    %968 = vst.msk [vmem:[#allocation2 + $0xe] sm:$0x1] %vm285, %v960
    %969 = vst.msk [vmem:[#allocation2 + $0x16] sm:$0x1] %vm285, %v961
    %970 = vst.msk [vmem:[#allocation2 + $0x1e] sm:$0x1] %vm285, %v962
    %v971 = vrot.slane %v145, 7
    %v972 = vrot.slane %v150, 6
    %v973 = vsel %vm172, %v972, %v971
    %v974 = vrot.slane %v155, 5
    %v975 = vsel %vm175, %v974, %v973
    %v976 = vrot.slane %v160, 4
    %v977 = vsel %vm178, %v976, %v975
    %v979 = vsel %vm181, %v937, 0
    %981 = vmatprep.subr.mxu0 0.0
    %982 = vmatpush1.msra.mxu0 0.0
    %983 = vmatprep.subr.mxu0 0.0
    %984 = vmatpush1.msra.mxu0 0.0
    %985 = vmatprep.subr.mxu0 0.0
    %986 = vmatpush1.msra.mxu0 0.0
    %987 = vmatprep.subr.mxu0 0.0
    %988 = vmatpush1.msra.mxu0 0.0
    %989 = vmatprep.subr.mxu0 0.0
    %990 = vmatpush1.msra.mxu0 0.0
    %991 = vmatprep.subr.mxu0 0.0
    %992 = vmatpush1.msra.mxu0 0.0
    %993 = vmatprep.subr.mxu0 0.0
    %994 = vmatpush1.msra.mxu0 0.0
    %995 = vmatprep.subr.mxu0 0.0
    %996 = vmatpush1.msra.mxu0 0.0
    %997 = vmatprep.subr.mxu0 0.0
    %998 = vmatpush1.msra.mxu0 0.0
    %999 = vmatprep.subr.mxu0 0.0
    %1000 = vmatpush1.msra.mxu0 0.0
    %1001 = vmatprep.subr.mxu0 0.0
    %1002 = vmatpush1.msra.mxu0 0.0
    %1003 = vmatprep.subr.mxu0 0.0
    %1004 = vmatpush1.msra.mxu0 0.0
    %1005 = vmatprep.subr.mxu0 0.0
    %1006 = vmatpush1.msra.mxu0 %v166
    %1007 = vmatprep.subr.mxu0 0.0
    %1008 = vmatpush1.msra.mxu0 %v165
    %1009 = vmatprep.subr.mxu0 0.0
    %1010 = vmatpush1.msra.mxu0 %v164
    %1011 = vmatprep.subr.mxu0 0.0
    %1012 = vmatpush1.msra.mxu0 %v163
    %1013 = vmatprep.subr.mxu0 0.0
    %1014 = vmatpush2.msra.mxu0 0.0
    %1015 = vmatprep.subr.mxu0 0.0
    %1016 = vmatpush2.msra.mxu0 0.0
    %1017 = vmatprep.subr.mxu0 0.0
    %1018 = vmatpush2.msra.mxu0 0.0
    %1019 = vmatprep.subr.mxu0 0.0
    %1020 = vmatpush2.msra.mxu0 0.0
    %1021 = vmatprep.subr.mxu0 0.0
    %1022 = vmatpush2.msra.mxu0 0.0
    %1023 = vmatprep.subr.mxu0 0.0
    %1024 = vmatpush2.msra.mxu0 0.0
    %1025 = vmatprep.subr.mxu0 0.0
    %1026 = vmatpush2.msra.mxu0 0.0
    %1027 = vmatprep.subr.mxu0 0.0
    %1028 = vmatpush2.msra.mxu0 0.0
    %1029 = vmatprep.subr.mxu0 0.0
    %1030 = vmatpush2.msra.mxu0 0.0
    %1031 = vmatprep.subr.mxu0 0.0
    %1032 = vmatpush2.msra.mxu0 0.0
    %1033 = vmatprep.subr.mxu0 0.0
    %1034 = vmatpush2.msra.mxu0 0.0
    %1035 = vmatprep.subr.mxu0 0.0
    %1036 = vmatpush2.msra.mxu0 0.0
    %1037 = vmatprep.subr.mxu0 0.0
    %1038 = vmatpush2.msra.mxu0 0.0
    %1039 = vmatprep.subr.mxu0 0.0
    %1040 = vmatpush2.msra.mxu0 0.0
    %1041 = vmatprep.subr.mxu0 0.0
    %1042 = vmatpush2.msra.mxu0 0.0
    %1043 = vmatprep.subr.mxu0 0.0
    %1044 = vmatpush2.msra.mxu0 0.0
    %1045 = vmatprep.mubr.f32.mxu0 0.0
    %1046 = vmatmul.mubr.f32.gmra.mxu0 %v979
    %v1047 = vpop.f32.mrf.mxu0
    %v1048 = vadd.f32 %v977, %v1047
    %v1049 = vpop.f32.mrf.mxu0
    %1050 = vdwg.mxu0
    %v1051 = vtanh.pop %v1048
    %v1054 = vunpack.c.l.s4 1966171168
    %v1055 = vunpack.c.0.s8 %v1054
    %v1056 = vlaneseq
    %v1057 = vshrl.u32 %v1056, 7
    %v1058 = vsub.s32 %v1055, %v1057
    %v1059 = vrot.slane %v1051, %v1058
    %v1060 = vcombine.high %v1059, %v1059
    %v1062 = vunpack.c.l.s4 1966171168
    %v1063 = vunpack.c.0.s8 %v1062
    %v1064 = vlaneseq
    %v1065 = vshrl.u32 %v1064, 7
    %v1066 = vsub.s32 %v1063, %v1065
    %v1067 = vrot.slane %v1059, %v1066
    %v1069 = vunpack.c.l.s4 1966171168
    %v1070 = vunpack.c.0.s8 %v1069
    %v1071 = vlaneseq
    %v1072 = vshrl.u32 %v1071, 7
    %v1073 = vsub.s32 %v1070, %v1072
    %v1074 = vrot.slane %v1060, %v1073
    %v1075 = vcombine.high %v1067, %v1067
    %v1076 = vcombine.high %v1074, %v1074
    %1081 = vst.msk [vmem:[#allocation2 + $0x7] sm:$0x1] %vm285, %v1067
    %1082 = vst.msk [vmem:[#allocation2 + $0xf] sm:$0x1] %vm285, %v1074
    %1083 = vst.msk [vmem:[#allocation2 + $0x17] sm:$0x1] %vm285, %v1075
    %1084 = vst.msk [vmem:[#allocation2 + $0x1f] sm:$0x1] %vm285, %v1076
    %v1085 = vld [vmem:[#allocation2] sm:$0xff]
    %v1086 = vld [vmem:[#allocation2 + $0x8] sm:$0xff]
    %v1087 = vld [vmem:[#allocation2 + $0x10] sm:$0xff]
    %v1088 = vld [vmem:[#allocation2 + $0x18] sm:$0xff]
    %v1089 = vld [vmem:[%s4] sm:$0xff]
    %v1090 = vld [vmem:[%s4 + $0x8] sm:$0xff]
    %v1091 = vld [vmem:[%s4 + $0x10] sm:$0xff]
    %v1092 = vld [vmem:[%s4 + $0x18] sm:$0xff]
    %v1093 = vld [vmem:[%s5] sm:$0x1]
    %v1095 = vlaneseq
    %v1096 = vshrl.u32 %v1095, 7
    %v1097 = vsub.s32 0, %v1096
    %v1098 = vrot.slane %v1093, %v1097
    %v1101 = vsel %vm181, %v1085, 0
    %v1104 = vsel %vm181, %v1086, 0
    %v1107 = vsel %vm181, %v1087, 0
    %v1110 = vsel %vm181, %v1088, 0
    %1112 = vmatprep.subr.mxu0 0.0
    %1113 = vmatpush1.msra.mxu0 0.0
    %1114 = vmatprep.subr.mxu0 0.0
    %1115 = vmatpush1.msra.mxu0 0.0
    %1116 = vmatprep.subr.mxu0 0.0
    %1117 = vmatpush1.msra.mxu0 0.0
    %1118 = vmatprep.subr.mxu0 0.0
    %1119 = vmatpush1.msra.mxu0 0.0
    %1120 = vmatprep.subr.mxu0 0.0
    %1121 = vmatpush1.msra.mxu0 0.0
    %1122 = vmatprep.subr.mxu0 0.0
    %1123 = vmatpush1.msra.mxu0 0.0
    %1124 = vmatprep.subr.mxu0 0.0
    %1125 = vmatpush1.msra.mxu0 0.0
    %1126 = vmatprep.subr.mxu0 0.0
    %1127 = vmatpush1.msra.mxu0 0.0
    %1128 = vmatprep.subr.mxu0 0.0
    %1129 = vmatpush1.msra.mxu0 0.0
    %1130 = vmatprep.subr.mxu0 0.0
    %1131 = vmatpush1.msra.mxu0 0.0
    %1132 = vmatprep.subr.mxu0 0.0
    %1133 = vmatpush1.msra.mxu0 0.0
    %1134 = vmatprep.subr.mxu0 0.0
    %1135 = vmatpush1.msra.mxu0 0.0
    %1136 = vmatprep.subr.mxu0 0.0
    %1137 = vmatpush1.msra.mxu0 %v1092
    %1138 = vmatprep.subr.mxu0 0.0
    %1139 = vmatpush1.msra.mxu0 %v1091
    %1140 = vmatprep.subr.mxu0 0.0
    %1141 = vmatpush1.msra.mxu0 %v1090
    %1142 = vmatprep.subr.mxu0 0.0
    %1143 = vmatpush1.msra.mxu0 %v1089
    %1144 = vmatprep.subr.mxu0 0.0
    %1145 = vmatpush2.msra.mxu0 0.0
    %1146 = vmatprep.subr.mxu0 0.0
    %1147 = vmatpush2.msra.mxu0 0.0
    %1148 = vmatprep.subr.mxu0 0.0
    %1149 = vmatpush2.msra.mxu0 0.0
    %1150 = vmatprep.subr.mxu0 0.0
    %1151 = vmatpush2.msra.mxu0 0.0
    %1152 = vmatprep.subr.mxu0 0.0
    %1153 = vmatpush2.msra.mxu0 0.0
    %1154 = vmatprep.subr.mxu0 0.0
    %1155 = vmatpush2.msra.mxu0 0.0
    %1156 = vmatprep.subr.mxu0 0.0
    %1157 = vmatpush2.msra.mxu0 0.0
    %1158 = vmatprep.subr.mxu0 0.0
    %1159 = vmatpush2.msra.mxu0 0.0
    %1160 = vmatprep.subr.mxu0 0.0
    %1161 = vmatpush2.msra.mxu0 0.0
    %1162 = vmatprep.subr.mxu0 0.0
    %1163 = vmatpush2.msra.mxu0 0.0
    %1164 = vmatprep.subr.mxu0 0.0
    %1165 = vmatpush2.msra.mxu0 0.0
    %1166 = vmatprep.subr.mxu0 0.0
    %1167 = vmatpush2.msra.mxu0 0.0
    %1168 = vmatprep.subr.mxu0 0.0
    %1169 = vmatpush2.msra.mxu0 0.0
    %1170 = vmatprep.subr.mxu0 0.0
    %1171 = vmatpush2.msra.mxu0 0.0
    %1172 = vmatprep.subr.mxu0 0.0
    %1173 = vmatpush2.msra.mxu0 0.0
    %1174 = vmatprep.subr.mxu0 0.0
    %1175 = vmatpush2.msra.mxu0 0.0
    %1176 = vmatprep.mubr.f32.mxu0 0.0
    %1177 = vmatmul.mubr.f32.gmra.mxu0 %v1101
    %v1178 = vpop.f32.mrf.mxu0
    %v1179 = vadd.f32 %v1098, %v1178
    %v1180 = vpop.f32.mrf.mxu0
    %1181 = vmatprep.mubr.f32.mxu0 0.0
    %1182 = vmatmul.mubr.f32.gmra.mxu0 %v1104
    %v1183 = vpop.f32.mrf.mxu0
    %v1184 = vadd.f32 %v1098, %v1183
    %v1185 = vpop.f32.mrf.mxu0
    %1186 = vmatprep.mubr.f32.mxu0 0.0
    %1187 = vmatmul.mubr.f32.gmra.mxu0 %v1107
    %v1188 = vpop.f32.mrf.mxu0
    %v1189 = vadd.f32 %v1098, %v1188
    %v1190 = vpop.f32.mrf.mxu0
    %1191 = vmatprep.mubr.f32.mxu0 0.0
    %1192 = vmatmul.mubr.f32.gmra.mxu0 %v1110
    %v1193 = vpop.f32.mrf.mxu0
    %v1194 = vadd.f32 %v1098, %v1193
    %v1195 = vpop.f32.mrf.mxu0
    %1196 = vdwg.mxu0
    %vm1197 = vcmask 64512
    %1198 = vst.msk [vmem:[#allocation8] sm:$0xff] %vm1197, %v1179
    %1199 = vst.msk [vmem:[#allocation8 + $0x8] sm:$0xff] %vm1197, %v1184
    %1200 = vst.msk [vmem:[#allocation8 + $0x10] sm:$0xff] %vm1197, %v1189
    %1201 = vst.msk [vmem:[#allocation8 + $0x18] sm:$0xff] %vm1197, %v1194
    // Predicated region
    $region34: #{tpu_custom_call.1} parent=1 // pred_check
      _
    $region35: #{tpu_custom_call.1} parent=1 // pred_check_branch
      %1203 = sbr.rel (0) target = $region37
    $region36: #{tpu_custom_call.1} parent=1 // pred_region
      %s1205 = ssub.s32 512, 512
      %1206 = vsyncadd [#allocation5], %s1205
      %s1207 = sshll.u32 [#allocation8], 4
      %s1208 = int_to_ptr.vmem [resolvable:$true] %s1207
      %1213 = dma.vmem_to_hbm [thread:$0]  %s1208, 512, %s6, [#allocation5], 128, 128, 8
    $region37: #{tpu_custom_call.1} parent=1 // pred_fallthru
      _
    // Predicated region
    $region38: #{tpu_custom_call.1} parent=1 // pred_check
      _
    $region39: #{tpu_custom_call.1} parent=1 // pred_check_branch
      %1215 = sbr.rel (0) target = $region41
    $region40: #{tpu_custom_call.1} parent=1 // pred_region
      %1216 = dma.done [#allocation5], 512
    $region41: #{tpu_custom_call.1} parent=1 // pred_fallthru
      _
    %1217 = vsyncpa [#allocation4], 1
    %1218 = vsyncpa [#allocation7], 1
    %1219 = vsyncpa [#allocation5], 1

</llo_original>
